<compile_context>
chip_gen: v6e
topology: v6e:2x2x1
jax: 0.10.0
libtpu: 0.0.40
codegen_flags: <defaults>
</compile_context>

<pallas_src>
import jax
import jax.numpy as jnp
from jax.experimental import pallas as pl
from jax.experimental.pallas import tpu as pltpu


def convbnact_kernel(x_ref, w_ref, shift_ref, o_ref):
    # x_ref:     (1, C_in,  T_HW)  activation tile (bf16 or f32)
    # w_ref:     (1, C_out, C_in)  per-sample expert-mixed, BN-folded weight
    # shift_ref: (C_out, 1)        BN shift (beta - mean*scale), f32
    # o_ref:     (1, C_out, T_HW)  output tile, f32
    y = jnp.dot(w_ref[0], x_ref[0], preferred_element_type=jnp.float32)
    y = y + shift_ref[...]                      # broadcast over lanes (VPU)
    o_ref[0] = jnp.maximum(y, 0.0).astype(o_ref.dtype)


def _pick_hw_tile(hw, max_tile=2048):
    """Largest multiple of 128 that divides HW and is <= max_tile (else full HW)."""
    if hw % 128 != 0:
        return hw                       # full-extent block is always legal
    t = min(hw, max_tile)
    t -= t % 128
    while hw % t != 0:
        t -= 128
    return t


def conv_bn_act(x_nchw, params, *, compute_dtype=jnp.bfloat16, eps=1e-5):
    B, C_in, H, W = x_nchw.shape
    HW = H * W
    E, C_out, _ = params["ew"].shape

    x32 = x_nchw.astype(jnp.float32)

    # ---- tiny prep math in XLA: routing + expert mix + BN fold (O(B*E*Co*Ci))
    pooled = x32.mean(axis=(2, 3))                                          # (B, C_in)
    r = jax.nn.sigmoid(pooled @ params["wr"].astype(jnp.float32).T
                       + params["br"].astype(jnp.float32))                  # (B, E)
    w_mix = jnp.einsum("be,eoc->boc", r, params["ew"].astype(jnp.float32))  # (B,Co,Ci)
    scale = params["gamma"].astype(jnp.float32) * jax.lax.rsqrt(
        params["var"].astype(jnp.float32) + eps)                            # (C_out,)
    shift = (params["beta"].astype(jnp.float32)
             - params["mean"].astype(jnp.float32) * scale)                  # (C_out,)
    w_fold = (w_mix * scale[None, :, None]).astype(compute_dtype)           # (B,Co,Ci)

    x3 = x32.reshape(B, C_in, HW).astype(compute_dtype)
    shift_col = shift.reshape(C_out, 1)

    t_hw = _pick_hw_tile(HW)
    grid = (B, HW // t_hw)

    out = pl.pallas_call(
        convbnact_kernel,
        out_shape=jax.ShapeDtypeStruct((B, C_out, HW), jnp.float32),
        grid=grid,
        in_specs=[
            pl.BlockSpec((1, C_in, t_hw), lambda b, t: (b, 0, t)),
            pl.BlockSpec((1, C_out, C_in), lambda b, t: (b, 0, 0)),
            pl.BlockSpec((C_out, 1), lambda b, t: (0, 0)),
        ],
        out_specs=pl.BlockSpec((1, C_out, t_hw), lambda b, t: (b, 0, t)),
        compiler_params=pltpu.CompilerParams(
            dimension_semantics=("parallel", "parallel"),
            vmem_limit_bytes=64 << 20),
    )(x3, w_fold, shift_col)
    return out.reshape(B, C_out, H, W)


def reference(x_nchw, params, eps=1e-5):
    """Pure-JAX replica of the PyTorch forward (eval-mode BN)."""
    B, C_in, H, W = x_nchw.shape
    E, C_out, _ = params["ew"].shape
    pooled = x_nchw.mean(axis=(2, 3))                                   # (B, C_in)
    r = jax.nn.sigmoid(pooled @ params["wr"].T + params["br"])          # (B, E)
    w = (r @ params["ew"].reshape(E, -1)).reshape(B, C_out, C_in)       # (B, Co, Ci)
    y = jnp.einsum("boc,bchw->bohw", w, x_nchw)                         # 1x1 cond conv
    g = params["gamma"][None, :, None, None]
    b = params["beta"][None, :, None, None]
    m = params["mean"][None, :, None, None]
    v = params["var"][None, :, None, None]
    y = (y - m) * (g / jnp.sqrt(v + eps)) + b
    return jnp.maximum(y, 0.0)


if __name__ == "__main__":
    B, C_in, C_out, H, W, E = 2, 8, 8, 16, 16, 4

    key = jax.random.PRNGKey(0)
    ks = jax.random.split(key, 8)
    params = {
        "wr":    0.1 * jax.random.normal(ks[0], (E, C_in), jnp.float32),
        "br":    0.1 * jax.random.normal(ks[1], (E,), jnp.float32),
        "ew":    jax.random.normal(ks[2], (E, C_out, C_in), jnp.float32) / jnp.sqrt(C_in),
        "gamma": 1.0 + 0.1 * jax.random.normal(ks[3], (C_out,), jnp.float32),
        "beta":  0.1 * jax.random.normal(ks[4], (C_out,), jnp.float32),
        "mean":  0.1 * jax.random.normal(ks[5], (C_out,), jnp.float32),
        "var":   jnp.abs(jax.random.normal(ks[6], (C_out,), jnp.float32)) + 0.5,
    }
    x = jax.random.normal(ks[7], (B, C_in, H, W), jnp.float32)

    ref = jax.block_until_ready(reference(x, params))

    # exact-path check (f32 streams)
    out_f32 = jax.block_until_ready(conv_bn_act(x, params, compute_dtype=jnp.float32))
    assert out_f32.shape == (B, C_out, H, W)
    assert jnp.allclose(out_f32, ref, rtol=1e-4, atol=1e-4), \
        f"f32 max abs err {jnp.max(jnp.abs(out_f32 - ref))}"

    # performance path (bf16 streams, f32 accumulation)
    out_bf16 = jax.block_until_ready(conv_bn_act(x, params, compute_dtype=jnp.bfloat16))
    assert out_bf16.shape == (B, C_out, H, W)
    assert jnp.allclose(out_bf16, ref, rtol=5e-2, atol=5e-2), \
        f"bf16 max abs err {jnp.max(jnp.abs(out_bf16 - ref))}"

    print("KERNEL_OK")
</pallas_src>

<mosaic_0001>
module attributes {stable_mosaic.version = 11 : i64} {
  func.func @convbnact_kernel(%arg0: i32, %arg1: i32, %arg2: memref<1x8x256xf32, #tpu.memory_space<vmem>>, %arg3: memref<1x8x8xf32, #tpu.memory_space<vmem>>, %arg4: memref<8x1xf32, #tpu.memory_space<vmem>>, %arg5: memref<1x8x256xf32, #tpu.memory_space<vmem>>) attributes {dimension_semantics = [#tpu.dimension_semantics<parallel>, #tpu.dimension_semantics<parallel>], iteration_bounds = array<i64: 2, 1>, scalar_prefetch = 0 : i64, scratch_operands = 0 : i64, tpu.core_type = #tpu.core_type<tc>, window_params = [{transform_indices = @transform_0, window_bounds = array<i64: 1, 8, 256>}, {transform_indices = @transform_1, window_bounds = array<i64: 1, 8, 8>}, {pipeline_mode = #tpu.pipeline_mode<synchronous>, transform_indices = @transform_2, window_bounds = array<i64: 8, 1>}, {transform_indices = @transform_3, window_bounds = array<i64: 1, 8, 256>}]} {
    %c0 = arith.constant 0 : index
    %c0_0 = arith.constant 0 : index
    %c0_1 = arith.constant 0 : index
    %0 = vector.load %arg3[%c0, %c0_0, %c0_1] : memref<1x8x8xf32, #tpu.memory_space<vmem>>, vector<1x8x8xf32>
    %1 = vector.shape_cast %0 : vector<1x8x8xf32> to vector<8x8xf32>
    %c0_2 = arith.constant 0 : index
    %c0_3 = arith.constant 0 : index
    %c0_4 = arith.constant 0 : index
    %2 = vector.load %arg2[%c0_2, %c0_3, %c0_4] : memref<1x8x256xf32, #tpu.memory_space<vmem>>, vector<1x8x256xf32>
    %3 = vector.shape_cast %2 : vector<1x8x256xf32> to vector<8x256xf32>
    %cst = arith.constant dense<0.000000e+00> : vector<8x256xf32>
    %4 = tpu.matmul %1, %3, %cst {dimension_numbers = #tpu.dot_dimension_numbers<[1], [0], [0], [1], [0, 0, 1, 1], [], []>} : vector<8x8xf32>, vector<8x256xf32>, vector<8x256xf32> -> vector<8x256xf32>
    %c0_5 = arith.constant 0 : index
    %c0_6 = arith.constant 0 : index
    %5 = vector.load %arg4[%c0_5, %c0_6] : memref<8x1xf32, #tpu.memory_space<vmem>>, vector<8x1xf32>
    %6 = vector.broadcast %5 : vector<8x1xf32> to vector<8x256xf32>
    %7 = arith.addf %4, %6 : vector<8x256xf32>
    %cst_7 = arith.constant 0.000000e+00 : f32
    %8 = vector.broadcast %cst_7 : f32 to vector<8x256xf32>
    %9 = arith.maximumf %7, %8 : vector<8x256xf32>
    %c0_8 = arith.constant 0 : index
    %c0_9 = arith.constant 0 : index
    %c0_10 = arith.constant 0 : index
    %10 = vector.load %arg5[%c0_8, %c0_9, %c0_10] : memref<1x8x256xf32, #tpu.memory_space<vmem>>, vector<1x8x256xf32>
    %11 = vector.shape_cast %10 : vector<1x8x256xf32> to vector<8x256xf32>
    %12 = vector.shape_cast %9 : vector<8x256xf32> to vector<1x8x256xf32>
    tpu.vector_store %arg5[%c0_8, %c0_9, %c0_10], %12 {strides = array<i32>} : memref<1x8x256xf32, #tpu.memory_space<vmem>>, vector<1x8x256xf32>,
    return
  }
  func.func @transform_0(%arg0: i32, %arg1: i32) -> (i32, i32, i32) {
    %c0_i32 = arith.constant 0 : i32
    %c0_i32_0 = arith.constant 0 : i32
    return %arg0, %c0_i32, %arg1 : i32, i32, i32
  }
  func.func @transform_1(%arg0: i32, %arg1: i32) -> (i32, i32, i32) {
    %c0_i32 = arith.constant 0 : i32
    %c0_i32_0 = arith.constant 0 : i32
    %c0_i32_1 = arith.constant 0 : i32
    return %arg0, %c0_i32, %c0_i32_0 : i32, i32, i32
  }
  func.func @transform_2(%arg0: i32, %arg1: i32) -> (i32, i32) {
    %c0_i32 = arith.constant 0 : i32
    %c0_i32_0 = arith.constant 0 : i32
    %c0_i32_1 = arith.constant 0 : i32
    return %c0_i32, %c0_i32_0 : i32, i32
  }
  func.func @transform_3(%arg0: i32, %arg1: i32) -> (i32, i32, i32) {
    %c0_i32 = arith.constant 0 : i32
    %c0_i32_0 = arith.constant 0 : i32
    return %arg0, %c0_i32, %arg1 : i32, i32, i32
  }
}

</mosaic_0001>

<llo_original>
// kernel: tpu_custom_call.1
$region0: #{tpu_custom_call.1}
  #allocation0 [shape = 'u32[]', space=smem, size = 0x4, offset = 0x4, fixed_abs, tag = 'smem constant byte address 0x4 - core index']
  #allocation1 [shape = 'u32[144,128]{1,0:T(1,128)}', space=vmem, size = 0x12000, scoped, tag = 'internal scratch']
  %s0 = inlined_call_operand.hbm [shape: f32[2,8,256], index: 0, kind: input, shape index: {}]
  %s1 = inlined_call_operand.hbm [shape: f32[2,8,8], index: 1, kind: input, shape index: {}]
  %s2 = inlined_call_operand.vmem [shape: f32[8,1], index: 2, kind: input, shape index: {}]
  %s3 = inlined_call_operand.hbm [shape: f32[2,8,256], index: 3, kind: output, shape index: {}]
  %s4 = sld [smem:[#allocation0]]
  $region53: #{tpu_custom_call.1} parent=0
    _
  %s6 = ssub.s32 1, %s4
  %s7 = scalar_select 0, %s6, %s4
  $region1: #{tpu_custom_call.1} parent=0
    #allocation2 [shape = 'u8[16384]{0}', space=vmem, size = 0x4000, scoped, tag = 'input window, operand 0']
    #allocation3 [shape = 's32[2]{0}', space=sflag, size = 0x8, scoped, tag = 'scoped memory for tpu_custom_call.1']
    #allocation4 [shape = 's32[2]{0}', space=sflag, size = 0x8, scoped, tag = 'scoped memory for tpu_custom_call.1']
    #allocation5 [shape = 'u8[8192]{0}', space=vmem, size = 0x2000, scoped, tag = 'input window, operand 1']
    #allocation6 [shape = 's32[2]{0}', space=sflag, size = 0x8, scoped, tag = 'scoped memory for tpu_custom_call.1']
    #allocation7 [shape = 'u8[16384]{0}', space=vmem, size = 0x4000, scoped, tag = 'output window, operand 0']
    %8 = vsyncpa [#allocation3], 0
    %s9 = scalar_lea.sflag [#allocation3], 1
    %10 = vsyncpa %s9, 0
    %11 = vsyncpa [#allocation6], 0
    %s12 = scalar_lea.sflag [#allocation6], 1
    %13 = vsyncpa %s12, 0
    %14 = vsyncpa [#allocation4], 0
    %s15 = scalar_lea.sflag [#allocation4], 1
    %16 = vsyncpa %s15, 0
    loop: start=0, step=1, limit=4
    $region2: #{tpu_custom_call.1} parent=1 // loop_pre_header
      _
    $region3: #{tpu_custom_call.1} parent=1 // loop_header
      %s18 = sphi 0, %s22
      %p19 = scmp.ge.s32.totalorder %s18, 4
      %s25 = sphi 0, %s37
      %s26 = sphi 0, %s33
      %s27 = sphi 0, %s25
      %s28 = sphi 0, %s26
      %s29 = sphi 0, %s27
      %s30 = sphi 0, %s28
      %s42 = sphi 0, %s44
      %s45 = sphi 0, %s42
      %s46 = sphi 0, %s45
      %s62 = sphi 0, %s46
      %s68 = sphi 0, %s70
      %s71 = sphi 0, %s68
      %s72 = sphi 0, %s71
      %s88 = sphi 0, %s72
      %s92 = sphi 0, %s92
      %s94 = sphi 0, %s92
      %s95 = sphi 0, %s94
      %s109 = sphi 0, %s95
      %s117 = sphi 0, %s119
      %s120 = sphi 0, %s117
      %s121 = sphi 0, %s120
      %s137 = sphi 0, %s121
    $region4: #{tpu_custom_call.1} parent=1 // loop_header_branch
      %21 = sbr.rel (%p19) target = $region8
    $region5: #{tpu_custom_call.1} parent=1 // loop_body
      %s23 = ssub.s32 %s18, 1
      %s24 = ssub.s32 %s18, 2
      %s31 = sadd.s32 1, %s26
      %p32 = scmp.ge.s32.totalorder %s31, 1
      %s33 = scalar_select %p32, 0, %s31
      %s34 = sadd.s32 1, %s25
      %s35 = scalar_select %p32, %s34, %s25
      %p36 = scmp.ge.s32.totalorder %s35, 2
      %s37 = scalar_select %p36, 0, %s35
      %s38 = ssub.s32 %s25, %s37
      %s39 = ssub.s32 %s26, %s33
      %s40 = sor.u32 %s38, %s39
      %p41 = scmp.eq.s32.totalorder %s40, 0
      %s43 = sadd.s32 %s42, 1
      %s44 = scalar_select %p41, %s42, %s43
      %p47 = pneg %p41
      %p48 = scmp.eq.s32.totalorder %s18, 1
      %p49 = por %p47, %p48
      %p50 = scmp.ne.s32.totalorder %s42, %s45
      %p51 = scmp.eq.s32.totalorder %s18, 0
      %p52 = por %p50, %p51
      %p53 = scmp.ne.s32.totalorder %s42, %s45
      %p54 = scmp.eq.s32.totalorder %s23, 1
      %p55 = por %p53, %p54
      %p56 = scmp.ne.s32.totalorder %s45, %s46
      %p57 = scmp.eq.s32.totalorder %s23, 0
      %p58 = por %p56, %p57
      %p59 = scmp.ne.s32.totalorder %s45, %s46
      %p60 = scmp.eq.s32.totalorder %s24, 1
      %p61 = por %p59, %p60
      %p63 = scmp.ne.s32.totalorder %s46, %s62
      %p64 = scmp.eq.s32.totalorder %s24, 0
      %p65 = por %p63, %p64
      %s66 = ssub.s32 %s25, %s37
      %p67 = scmp.eq.s32.totalorder %s66, 0
      %s69 = sadd.s32 %s68, 1
      %s70 = scalar_select %p67, %s68, %s69
      %p73 = pneg %p67
      %p74 = scmp.eq.s32.totalorder %s18, 1
      %p75 = por %p73, %p74
      %p76 = scmp.ne.s32.totalorder %s68, %s71
      %p77 = scmp.eq.s32.totalorder %s18, 0
      %p78 = por %p76, %p77
      %p79 = scmp.ne.s32.totalorder %s68, %s71
      %p80 = scmp.eq.s32.totalorder %s23, 1
      %p81 = por %p79, %p80
      %p82 = scmp.ne.s32.totalorder %s71, %s72
      %p83 = scmp.eq.s32.totalorder %s23, 0
      %p84 = por %p82, %p83
      %p85 = scmp.ne.s32.totalorder %s71, %s72
      %p86 = scmp.eq.s32.totalorder %s24, 1
      %p87 = por %p85, %p86
      %p89 = scmp.ne.s32.totalorder %s72, %s88
      %p90 = scmp.eq.s32.totalorder %s24, 0
      %p91 = por %p89, %p90
      %s93 = sadd.s32 %s92, 1
      %p96 = scmp.eq.s32.totalorder %s18, 1
      %p97 = scmp.ne.s32.totalorder %s92, %s94
      %p98 = scmp.eq.s32.totalorder %s18, 0
      %p99 = por %p97, %p98
      %p100 = scmp.ne.s32.totalorder %s92, %s94
      %p101 = scmp.eq.s32.totalorder %s23, 1
      %p102 = por %p100, %p101
      %p103 = scmp.ne.s32.totalorder %s94, %s95
      %p104 = scmp.eq.s32.totalorder %s23, 0
      %p105 = por %p103, %p104
      %p106 = scmp.ne.s32.totalorder %s94, %s95
      %p107 = scmp.eq.s32.totalorder %s24, 1
      %p108 = por %p106, %p107
      %p110 = scmp.ne.s32.totalorder %s95, %s109
      %p111 = scmp.eq.s32.totalorder %s24, 0
      %p112 = por %p110, %p111
      %s113 = ssub.s32 %s25, %s37
      %s114 = ssub.s32 %s26, %s33
      %s115 = sor.u32 %s113, %s114
      %p116 = scmp.eq.s32.totalorder %s115, 0
      %s118 = sadd.s32 %s117, 1
      %s119 = scalar_select %p116, %s117, %s118
      %p122 = pneg %p116
      %p123 = scmp.eq.s32.totalorder %s18, 1
      %p124 = por %p122, %p123
      %p125 = scmp.ne.s32.totalorder %s117, %s120
      %p126 = scmp.eq.s32.totalorder %s18, 0
      %p127 = por %p125, %p126
      %p128 = scmp.ne.s32.totalorder %s117, %s120
      %p129 = scmp.eq.s32.totalorder %s23, 1
      %p130 = por %p128, %p129
      %p131 = scmp.ne.s32.totalorder %s120, %s121
      %p132 = scmp.eq.s32.totalorder %s23, 0
      %p133 = por %p131, %p132
      %p134 = scmp.ne.s32.totalorder %s120, %s121
      %p135 = scmp.eq.s32.totalorder %s24, 1
      %p136 = por %p134, %p135
      %p138 = scmp.ne.s32.totalorder %s121, %s137
      %p139 = scmp.eq.s32.totalorder %s24, 0
      %p140 = por %p138, %p139
      %p141 = scmp.le.s32.totalorder 1, %s18
      %p142 = scmp.lt.s32.totalorder %s18, 3
      %p143 = pnand %p141, %p142
      %p144 = pneg %p143
      // Predicated region
      $region9: #{tpu_custom_call.1} parent=5 // pred_check
        _
      $region10: #{tpu_custom_call.1} parent=5 // pred_check_branch
        %146 = sbr.rel (%p143) target = $region12
      $region11: #{tpu_custom_call.1} parent=5 // pred_region
        %s147 = ssub.s32 %s18, 1
        // Predicated region
        $region13: #{tpu_custom_call.1} parent=11 // pred_check
          %p148 = pneg %p105
        $region14: #{tpu_custom_call.1} parent=11 // pred_check_branch
          %150 = sbr.rel (%p148) target = $region16
        $region15: #{tpu_custom_call.1} parent=11 // pred_region
          _
        $region16: #{tpu_custom_call.1} parent=11 // pred_fallthru
          _
      $region12: #{tpu_custom_call.1} parent=5 // pred_fallthru
        _
      %p151 = scmp.lt.s32.totalorder %s18, 2
      // Predicated region
      $region17: #{tpu_custom_call.1} parent=5 // pred_check
        %p152 = pneg %p151
      $region18: #{tpu_custom_call.1} parent=5 // pred_check_branch
        %154 = sbr.rel (%p152) target = $region20
      $region19: #{tpu_custom_call.1} parent=5 // pred_region
        // Predicated region
        $region21: #{tpu_custom_call.1} parent=19 // pred_check
          %p155 = pneg %p52
        $region22: #{tpu_custom_call.1} parent=19 // pred_check_branch
          %157 = sbr.rel (%p155) target = $region24
        $region23: #{tpu_custom_call.1} parent=19 // pred_region
          %s158 = sand.u32 %s42, 1
          %s159 = scalar_lea.sflag [#allocation3], %s158
          %s160 = sand.u32 %s42, 1
          %s161 = smul.addr %s160, 16
          %s162 = scalar_lea.vmem [#allocation2], %s161
          %s163 = smul.u32 2, %s26
          %s165 = ssub.s32 256, 256
          %166 = vsyncadd %s159, %s165
          %s167 = smul.addr %s25, 2
          %s168 = sadd.s32 %s163, %s167
          %s169 = smul.addr %s168, 128
          %s170 = scalar_lea.hbm %s0, %s169
          %s172 = sshll.u32 %s162, 4
          %s173 = int_to_ptr.vmem [resolvable:$true] %s172
          %175 = dma.hbm_to_vmem [thread:$0]  %s170, 256, %s173, %s159
        $region24: #{tpu_custom_call.1} parent=19 // pred_fallthru
          _
        // Predicated region
        $region25: #{tpu_custom_call.1} parent=19 // pred_check
          %p176 = pneg %p78
        $region26: #{tpu_custom_call.1} parent=19 // pred_check_branch
          %178 = sbr.rel (%p176) target = $region28
        $region27: #{tpu_custom_call.1} parent=19 // pred_region
          %s179 = sand.u32 %s68, 1
          %s180 = scalar_lea.sflag [#allocation6], %s179
          %s181 = sand.u32 %s68, 1
          %s182 = smul.addr %s181, 8
          %s183 = scalar_lea.vmem [#allocation5], %s182
          %s185 = ssub.s32 128, 128
          %186 = vsyncadd %s180, %s185
          %s187 = smul.addr %s25, 128
          %s188 = scalar_lea.hbm %s1, %s187
          %s190 = sshll.u32 %s183, 4
          %s191 = int_to_ptr.vmem [resolvable:$true] %s190
          %193 = dma.hbm_to_vmem [thread:$0]  %s188, 128, %s191, %s180
        $region28: #{tpu_custom_call.1} parent=19 // pred_fallthru
          _
      $region20: #{tpu_custom_call.1} parent=5 // pred_fallthru
        _
      %p194 = scmp.le.s32.totalorder 1, %s18
      %p195 = scmp.lt.s32.totalorder %s18, 3
      %p196 = pnand %p194, %p195
      %p197 = pneg %p196
      // Predicated region
      $region29: #{tpu_custom_call.1} parent=5 // pred_check
        _
      $region30: #{tpu_custom_call.1} parent=5 // pred_check_branch
        %199 = sbr.rel (%p196) target = $region32
      $region31: #{tpu_custom_call.1} parent=5 // pred_region
        %s200 = ssub.s32 %s18, 1
        %s201 = sand.u32 %s45, 1
        %s202 = scalar_lea.sflag [#allocation3], %s201
        %s203 = sand.u32 %s45, 1
        %s204 = smul.addr %s203, 16
        %s205 = scalar_lea.vmem [#allocation2], %s204
        // Predicated region
        $region33: #{tpu_custom_call.1} parent=31 // pred_check
          %p206 = pneg %p58
        $region34: #{tpu_custom_call.1} parent=31 // pred_check_branch
          %208 = sbr.rel (%p206) target = $region36
        $region35: #{tpu_custom_call.1} parent=31 // pred_region
          %209 = dma.done %s202, 256
        $region36: #{tpu_custom_call.1} parent=31 // pred_fallthru
          _
        %s210 = sand.u32 %s71, 1
        %s211 = scalar_lea.sflag [#allocation6], %s210
        %s212 = sand.u32 %s71, 1
        %s213 = smul.addr %s212, 8
        %s214 = scalar_lea.vmem [#allocation5], %s213
        // Predicated region
        $region37: #{tpu_custom_call.1} parent=31 // pred_check
          %p215 = pneg %p84
        $region38: #{tpu_custom_call.1} parent=31 // pred_check_branch
          %217 = sbr.rel (%p215) target = $region40
        $region39: #{tpu_custom_call.1} parent=31 // pred_region
          %218 = dma.done %s211, 128
        $region40: #{tpu_custom_call.1} parent=31 // pred_fallthru
          _
        %s219 = sand.u32 %s45, 1
        %s220 = scalar_lea.sflag [#allocation3], %s219
        %s221 = sand.u32 %s45, 1
        %s222 = smul.addr %s221, 16
        %s223 = scalar_lea.vmem [#allocation2], %s222
        %p224 = pneg %p58
        %p225 = pneg %p55
        %s226 = sand.u32 %s71, 1
        %s227 = scalar_lea.sflag [#allocation6], %s226
        %s228 = sand.u32 %s71, 1
        %s229 = smul.addr %s228, 8
        %s230 = scalar_lea.vmem [#allocation5], %s229
        %p231 = pneg %p84
        %p232 = pneg %p81
        %p233 = pneg %p105
        %p234 = pneg %p102
        %p235 = pneg %p133
        %p236 = pneg %p130
        %s237 = sand.u32 %s120, 1
        %s238 = scalar_lea.sflag [#allocation4], %s237
        %s239 = sand.u32 %s120, 1
        %s240 = smul.addr %s239, 16
        %s241 = scalar_lea.vmem [#allocation7], %s240
        %s242 = smul.u32 2, %s28
        %s243 = smul.u32 2, %s28
        %v244 = vld [vmem:[%s214] sm:$0xff]
        %v245 = vld [vmem:[%s205] sm:$0xff]
        %v246 = vld [vmem:[%s205 + $0x8] sm:$0xff]
        %v247 = vld [vmem:[%s2] sm:$0xff]
        %249 = vset.pattern.permute.xlu0 0
        %250 = vperm.xlu0 %249, %v247
        %v251 = vpop.permute.xlu0 %250
        %vm253 = vcmask 64512
        %v255 = vsel %vm253, %v244, 0
        %257 = vmatprep.subr.mxu0 0.0
        %258 = vmatpush1.msra.mxu0 0.0
        %259 = vmatprep.subr.mxu0 0.0
        %260 = vmatpush1.msra.mxu0 0.0
        %261 = vmatprep.subr.mxu0 0.0
        %262 = vmatpush1.msra.mxu0 0.0
        %263 = vmatprep.subr.mxu0 0.0
        %264 = vmatpush1.msra.mxu0 0.0
        %265 = vmatprep.subr.mxu0 0.0
        %266 = vmatpush1.msra.mxu0 0.0
        %267 = vmatprep.subr.mxu0 0.0
        %268 = vmatpush1.msra.mxu0 0.0
        %269 = vmatprep.subr.mxu0 0.0
        %270 = vmatpush1.msra.mxu0 0.0
        %271 = vmatprep.subr.mxu0 0.0
        %272 = vmatpush1.msra.mxu0 0.0
        %273 = vmatprep.subr.mxu0 0.0
        %274 = vmatpush1.msra.mxu0 0.0
        %275 = vmatprep.subr.mxu0 0.0
        %276 = vmatpush1.msra.mxu0 0.0
        %277 = vmatprep.subr.mxu0 0.0
        %278 = vmatpush1.msra.mxu0 0.0
        %279 = vmatprep.subr.mxu0 0.0
        %280 = vmatpush1.msra.mxu0 0.0
        %281 = vmatprep.subr.mxu0 0.0
        %282 = vmatpush1.msra.mxu0 0.0
        %283 = vmatprep.subr.mxu0 0.0
        %284 = vmatpush1.msra.mxu0 0.0
        %285 = vmatprep.subr.mxu0 0.0
        %286 = vmatpush1.msra.mxu0 0.0
        %287 = vmatprep.subr.mxu0 %v246
        %288 = vmatpush1.msra.mxu0 %v245
        %289 = vmatprep.subr.mxu0 0.0
        %290 = vmatpush2.msra.mxu0 0.0
        %291 = vmatprep.subr.mxu0 0.0
        %292 = vmatpush2.msra.mxu0 0.0
        %293 = vmatprep.subr.mxu0 0.0
        %294 = vmatpush2.msra.mxu0 0.0
        %295 = vmatprep.subr.mxu0 0.0
        %296 = vmatpush2.msra.mxu0 0.0
        %297 = vmatprep.subr.mxu0 0.0
        %298 = vmatpush2.msra.mxu0 0.0
        %299 = vmatprep.subr.mxu0 0.0
        %300 = vmatpush2.msra.mxu0 0.0
        %301 = vmatprep.subr.mxu0 0.0
        %302 = vmatpush2.msra.mxu0 0.0
        %303 = vmatprep.subr.mxu0 0.0
        %304 = vmatpush2.msra.mxu0 0.0
        %305 = vmatprep.subr.mxu0 0.0
        %306 = vmatpush2.msra.mxu0 0.0
        %307 = vmatprep.subr.mxu0 0.0
        %308 = vmatpush2.msra.mxu0 0.0
        %309 = vmatprep.subr.mxu0 0.0
        %310 = vmatpush2.msra.mxu0 0.0
        %311 = vmatprep.subr.mxu0 0.0
        %312 = vmatpush2.msra.mxu0 0.0
        %313 = vmatprep.subr.mxu0 0.0
        %314 = vmatpush2.msra.mxu0 0.0
        %315 = vmatprep.subr.mxu0 0.0
        %316 = vmatpush2.msra.mxu0 0.0
        %317 = vmatprep.subr.mxu0 0.0
        %318 = vmatpush2.msra.mxu0 0.0
        %319 = vmatprep.subr.mxu0 0.0
        %320 = vmatpush2.msra.mxu0 0.0
        %321 = vmatprep.mubr.f32.mxu0 0.0
        %322 = vmatmul.mubr.f32.gmra.mxu0 %v255
        %v323 = vpop.f32.mrf.mxu0
        %v324 = vadd.f32 %v251, %v323
        %v325 = vpop.f32.mrf.mxu0
        %v326 = vadd.f32 %v251, %v325
        %327 = vdwg.mxu0
        %v328 = vmax.f32 %v324, 0.0
        %v329 = vmax.f32 %v326, 0.0
        %330 = vst [vmem:[%s241] sm:$0xff] %v328
        %331 = vst [vmem:[%s241 + $0x8] sm:$0xff] %v329
        %s332 = sand.u32 %s120, 1
        %s333 = scalar_lea.sflag [#allocation4], %s332
        %s334 = sand.u32 %s120, 1
        %s335 = smul.addr %s334, 16
        %s336 = scalar_lea.vmem [#allocation7], %s335
        // Predicated region
        $region41: #{tpu_custom_call.1} parent=31 // pred_check
          %p337 = pneg %p130
        $region42: #{tpu_custom_call.1} parent=31 // pred_check_branch
          %339 = sbr.rel (%p337) target = $region44
        $region43: #{tpu_custom_call.1} parent=31 // pred_region
          %s340 = smul.u32 2, %s28
          %s342 = ssub.s32 256, 256
          %343 = vsyncadd %s333, %s342
          %s344 = smul.addr %s27, 2
          %s345 = sadd.s32 %s340, %s344
          %s346 = smul.addr %s345, 128
          %s347 = scalar_lea.hbm %s3, %s346
          %s349 = sshll.u32 %s336, 4
          %s350 = int_to_ptr.vmem [resolvable:$true] %s349
          %352 = dma.vmem_to_hbm [thread:$0]  %s350, 256, %s347, %s333
        $region44: #{tpu_custom_call.1} parent=31 // pred_fallthru
          _
      $region32: #{tpu_custom_call.1} parent=5 // pred_fallthru
        _
      %p353 = scmp.le.s32.totalorder 2, %s18
      // Predicated region
      $region45: #{tpu_custom_call.1} parent=5 // pred_check
        %p354 = pneg %p353
      $region46: #{tpu_custom_call.1} parent=5 // pred_check_branch
        %356 = sbr.rel (%p354) target = $region48
      $region47: #{tpu_custom_call.1} parent=5 // pred_region
        %s357 = ssub.s32 %s18, 2
        // Predicated region
        $region49: #{tpu_custom_call.1} parent=47 // pred_check
          %p358 = pneg %p136
        $region50: #{tpu_custom_call.1} parent=47 // pred_check_branch
          %360 = sbr.rel (%p358) target = $region52
        $region51: #{tpu_custom_call.1} parent=47 // pred_region
          %s361 = sand.u32 %s121, 1
          %s362 = scalar_lea.sflag [#allocation4], %s361
          %s363 = sand.u32 %s121, 1
          %s364 = smul.addr %s363, 16
          %s365 = scalar_lea.vmem [#allocation7], %s364
          %366 = dma.done %s362, 256
        $region52: #{tpu_custom_call.1} parent=47 // pred_fallthru
          _
      $region48: #{tpu_custom_call.1} parent=5 // pred_fallthru
        _
    $region6: #{tpu_custom_call.1} parent=1 // loop_footer
      %s22 = sadd.s32 1, %s18
    $region7: #{tpu_custom_call.1} parent=1 // loop_footer_branch
      %17 = sbr.rel target = $region3
    $region8: #{tpu_custom_call.1} parent=1 // loop_exit
      _
    %367 = vsyncpa [#allocation3], 1
    %s368 = scalar_lea.sflag [#allocation3], 1
    %369 = vsyncpa %s368, 1
    %370 = vsyncpa [#allocation6], 1
    %s371 = scalar_lea.sflag [#allocation6], 1
    %372 = vsyncpa %s371, 1
    %373 = vsyncpa [#allocation4], 1
    %s374 = scalar_lea.sflag [#allocation4], 1
    %375 = vsyncpa %s374, 1

</llo_original>
